<compile_context>
chip_gen: v7x
topology: tpu7x:2x2x1
jax: 0.10.0
libtpu: 0.0.40
codegen_flags: <defaults>
</compile_context>

<pallas_src>
import functools

import jax
import jax.numpy as jnp
from jax import lax
from jax.experimental import pallas as pl
from jax.experimental.pallas import tpu as pltpu


def _self_attention_kernel(x_ref, wq_ref, bq_ref, wkv_ref, bkv_ref, gamma_ref,
                           o_ref, *, ck, tq):
    # x_ref:   (C, N)    activation for this batch element (channels-first)
    # wq_ref:  (Ck, C)   query 1x1-conv weight,        bq_ref:  (Ck, 1)
    # wkv_ref: (Ck+C, C) fused key/value 1x1-conv wts, bkv_ref: (Ck+C, 1)
    # o_ref:   (C, TQ)   output tile for query columns [qi*TQ, (qi+1)*TQ)
    qi = pl.program_id(1)
    qstart = pl.multiple_of(qi * tq, tq)

    x = x_ref[...].astype(jnp.float32)                                    # (C, N)
    x_q = x_ref[:, pl.ds(qstart, tq)].astype(jnp.float32)                 # (C, TQ)

    # Fused K/V projection over the full spatial extent (single MXU matmul).
    kv = jnp.dot(wkv_ref[...], x,
                 preferred_element_type=jnp.float32) + bkv_ref[...]       # (Ck+C, N)
    k = kv[:ck, :]                                                        # (Ck, N)
    v = kv[ck:, :]                                                        # (C,  N)

    # Q projection restricted to this query tile.
    q = jnp.dot(wq_ref[...], x_q,
                preferred_element_type=jnp.float32) + bq_ref[...]         # (Ck, TQ)

    # energy[m, n] = <q_:,m , k_:,n>.  (q.T is one tiny XLU transpose of an
    # (Ck, TQ) tile; all big operands stay in their native layout.)
    energy = jnp.dot(q.T, k, preferred_element_type=jnp.float32)          # (TQ, N)

    # Numerically-stable softmax over the key axis (last dim = lane axis).
    e = energy - jnp.max(energy, axis=-1, keepdims=True)
    p = jnp.exp(e)                                                        # EUP
    denom = jnp.sum(p, axis=-1, keepdims=True)
    attn = p * pl.reciprocal(denom, approx=True)                          # EUP recip

    # out[c, m] = sum_n v[c, n] * attn[m, n]  (contract key axis of both; NT matmul)
    out = lax.dot_general(v, attn, (((1,), (1,)), ((), ())),
                          preferred_element_type=jnp.float32)             # (C, TQ)

    gamma = gamma_ref[0, 0]
    o_ref[...] = (gamma * out + x_q).astype(o_ref.dtype)


def self_attention_pallas(x_nchw, wf, bf, wg, bg, wv, bv, gamma, *, tq=128):
    """x_nchw: (B, C, W, H) float32. Returns (B, C, W, H)."""
    B, C, W, H = x_nchw.shape
    N = W * H
    Ck = wf.shape[0]

    # NCHW -> (B, C, N): pure reshape, no HBM transpose.
    x = x_nchw.reshape(B, C, N)

    if N % tq != 0:           # fall back to a single query tile
        tq = N
    nq = N // tq

    # Pre-fuse the key/value 1x1-conv weights (both consume the full spatial
    # extent) and pre-orient everything so the kernel never transposes weights.
    w_kv = jnp.concatenate([wg, wv], axis=0)                    # (Ck + C, C)
    b_kv = jnp.concatenate([bg, bv], axis=0).reshape(Ck + C, 1)
    wq = wf
    bq = bf.reshape(Ck, 1)
    gamma2 = gamma.reshape(1, 1).astype(jnp.float32)

    kernel = functools.partial(_self_attention_kernel, ck=Ck, tq=tq)

    out = pl.pallas_call(
        kernel,
        out_shape=jax.ShapeDtypeStruct((B, C, N), x.dtype),
        grid=(B, nq),
        in_specs=[
            pl.BlockSpec((None, C, N), lambda b, qi: (b, 0, 0)),   # x (full spatial extent)
            pl.BlockSpec((Ck, C),      lambda b, qi: (0, 0)),      # W_q
            pl.BlockSpec((Ck, 1),      lambda b, qi: (0, 0)),      # b_q
            pl.BlockSpec((Ck + C, C),  lambda b, qi: (0, 0)),      # W_kv (fused)
            pl.BlockSpec((Ck + C, 1),  lambda b, qi: (0, 0)),      # b_kv (fused)
            pl.BlockSpec(memory_space=pltpu.SMEM),                 # gamma scalar
        ],
        out_specs=pl.BlockSpec((None, C, tq), lambda b, qi: (b, 0, qi)),
        compiler_params=pltpu.CompilerParams(
            dimension_semantics=("parallel", "parallel")),
    )(x, wq, bq, w_kv, b_kv, gamma2)

    # (B, C, N) -> NCHW: free reshape.
    return out.reshape(B, C, W, H)


def _spectral_norm(w):
    """Divide a (out, in) weight matrix by its largest singular value
    (exact; stands in for torch's power-iteration estimate)."""
    sigma = jnp.linalg.svd(w, compute_uv=False)[0]
    return w / sigma


def _init_params(key, in_filters, k=8):
    Ck = in_filters // k
    kf, kg, kv, kbf, kbg, kbv = jax.random.split(key, 6)
    # Conv2d 1x1 weights are (out, in, 1, 1); we keep them as (out, in).
    wf = _spectral_norm(jax.random.normal(kf, (Ck, in_filters), jnp.float32) * 0.1)
    wg = _spectral_norm(jax.random.normal(kg, (Ck, in_filters), jnp.float32) * 0.1)
    wv = _spectral_norm(jax.random.normal(kv, (in_filters, in_filters), jnp.float32) * 0.1)
    bf = jax.random.normal(kbf, (Ck,), jnp.float32) * 0.01
    bg = jax.random.normal(kbg, (Ck,), jnp.float32) * 0.01
    bv = jax.random.normal(kbv, (in_filters,), jnp.float32) * 0.01
    # Module inits gamma to zeros (which makes out == input); use a nonzero
    # value here so the attention path is actually exercised numerically.
    gamma = jnp.array([0.5], dtype=jnp.float32)
    return wf, bf, wg, bg, wv, bv, gamma


def _reference_jax(x_nchw, wf, bf, wg, bg, wv, bv, gamma):
    """Plain-JAX mirror of the PyTorch forward, for correctness checking."""
    B, C, W, H = x_nchw.shape
    N = W * H
    xf = x_nchw.reshape(B, C, N)                                          # (B, C, N)
    proj_query = jnp.einsum('oc,bcn->bno', wf, xf) + bf[None, None, :]    # (B, N, Ck)
    proj_key = jnp.einsum('oc,bcn->bon', wg, xf) + bg[None, :, None]      # (B, Ck, N)
    energy = jnp.einsum('bno,bom->bnm', proj_query, proj_key)             # (B, N, N)
    attention = jax.nn.softmax(energy, axis=-1)
    proj_value = jnp.einsum('oc,bcn->bon', wv, xf) + bv[None, :, None]    # (B, C, N)
    out = jnp.einsum('bcn,bmn->bcm', proj_value, attention)               # (B, C, N)
    out = out.reshape(B, C, W, H)
    return gamma[0] * out + x_nchw


if __name__ == "__main__":
    key = jax.random.PRNGKey(0)
    kx, kp = jax.random.split(key)

    B, C, W, H = 2, 64, 16, 16   # in_filters=64, k=8 -> Ck=8, N=256
    x = jax.random.normal(kx, (B, C, W, H), jnp.float32)
    params = _init_params(kp, C, k=8)

    y = jax.jit(self_attention_pallas)(x, *params)
    y = jax.block_until_ready(y)

    y_ref = _reference_jax(x, *params)
    assert y.shape == (B, C, W, H)
    # Slightly looser tolerance than pure-f32: the softmax denominator uses the
    # EUP approximate reciprocal (pl.reciprocal(..., approx=True)).
    err = jnp.max(jnp.abs(y - y_ref))
    assert jnp.allclose(y, y_ref, atol=1e-3, rtol=1e-3), f"max abs err {err}"

    print("KERNEL_OK")
</pallas_src>

<mosaic_0001>
module attributes {stable_mosaic.version = 11 : i64} {
  func.func @_self_attention_kernel(%arg0: i32, %arg1: i32, %arg2: memref<1x64x256xf32, #tpu.memory_space<vmem>>, %arg3: memref<8x64xf32, #tpu.memory_space<vmem>>, %arg4: memref<8x1xf32, #tpu.memory_space<vmem>>, %arg5: memref<72x64xf32, #tpu.memory_space<vmem>>, %arg6: memref<72x1xf32, #tpu.memory_space<vmem>>, %arg7: memref<1x1xf32, #tpu.memory_space<smem>>, %arg8: memref<1x64x128xf32, #tpu.memory_space<vmem>>) attributes {dimension_semantics = [#tpu.dimension_semantics<parallel>, #tpu.dimension_semantics<parallel>], iteration_bounds = array<i64: 2, 2>, scalar_prefetch = 0 : i64, scratch_operands = 0 : i64, tpu.core_type = #tpu.core_type<tc>, window_params = [{transform_indices = @transform_0, window_bounds = array<i64: 1, 64, 256>}, {pipeline_mode = #tpu.pipeline_mode<synchronous>, transform_indices = @transform_1, window_bounds = array<i64: 8, 64>}, {pipeline_mode = #tpu.pipeline_mode<synchronous>, transform_indices = @transform_2, window_bounds = array<i64: 8, 1>}, {pipeline_mode = #tpu.pipeline_mode<synchronous>, transform_indices = @transform_3, window_bounds = array<i64: 72, 64>}, {pipeline_mode = #tpu.pipeline_mode<synchronous>, transform_indices = @transform_4, window_bounds = array<i64: 72, 1>}, {transform_indices = @transform_5, window_bounds = array<i64: 1, 1>}, {transform_indices = @transform_6, window_bounds = array<i64: 1, 64, 128>}]} {
    %c128_i32 = arith.constant 128 : i32
    %0 = arith.muli %arg1, %c128_i32 : i32
    %1 = tpu.assume_multiple %0, 128 : i32
    %c0 = arith.constant 0 : index
    %c0_0 = arith.constant 0 : index
    %c0_1 = arith.constant 0 : index
    %2 = vector.load %arg2[%c0, %c0_0, %c0_1] : memref<1x64x256xf32, #tpu.memory_space<vmem>>, vector<1x64x256xf32>
    %3 = vector.shape_cast %2 : vector<1x64x256xf32> to vector<64x256xf32>
    %c0_2 = arith.constant 0 : index
    %c0_3 = arith.constant 0 : index
    %4 = arith.index_cast %1 : i32 to index
    %5 = vector.load %arg2[%c0_2, %c0_3, %4] : memref<1x64x256xf32, #tpu.memory_space<vmem>>, vector<1x64x128xf32>
    %6 = vector.shape_cast %5 : vector<1x64x128xf32> to vector<64x128xf32>
    %c0_4 = arith.constant 0 : index
    %c0_5 = arith.constant 0 : index
    %7 = vector.load %arg5[%c0_4, %c0_5] : memref<72x64xf32, #tpu.memory_space<vmem>>, vector<72x64xf32>
    %cst = arith.constant dense<0.000000e+00> : vector<72x256xf32>
    %8 = tpu.matmul %7, %3, %cst {dimension_numbers = #tpu.dot_dimension_numbers<[1], [0], [0], [1], [0, 0, 1, 1], [], []>} : vector<72x64xf32>, vector<64x256xf32>, vector<72x256xf32> -> vector<72x256xf32>
    %c0_6 = arith.constant 0 : index
    %c0_7 = arith.constant 0 : index
    %9 = vector.load %arg6[%c0_6, %c0_7] : memref<72x1xf32, #tpu.memory_space<vmem>>, vector<72x1xf32>
    %10 = vector.broadcast %9 : vector<72x1xf32> to vector<72x256xf32>
    %11 = arith.addf %8, %10 : vector<72x256xf32>
    %12 = vector.extract_strided_slice %11 {offsets = [0, 0], sizes = [8, 256], strides = [1, 1]} : vector<72x256xf32> to vector<8x256xf32>
    %13 = vector.extract_strided_slice %11 {offsets = [8, 0], sizes = [64, 256], strides = [1, 1]} : vector<72x256xf32> to vector<64x256xf32>
    %c0_8 = arith.constant 0 : index
    %c0_9 = arith.constant 0 : index
    %14 = vector.load %arg3[%c0_8, %c0_9] : memref<8x64xf32, #tpu.memory_space<vmem>>, vector<8x64xf32>
    %cst_10 = arith.constant dense<0.000000e+00> : vector<8x128xf32>
    %15 = tpu.matmul %14, %6, %cst_10 {dimension_numbers = #tpu.dot_dimension_numbers<[1], [0], [0], [1], [0, 0, 1, 1], [], []>} : vector<8x64xf32>, vector<64x128xf32>, vector<8x128xf32> -> vector<8x128xf32>
    %c0_11 = arith.constant 0 : index
    %c0_12 = arith.constant 0 : index
    %16 = vector.load %arg4[%c0_11, %c0_12] : memref<8x1xf32, #tpu.memory_space<vmem>>, vector<8x1xf32>
    %17 = vector.broadcast %16 : vector<8x1xf32> to vector<8x128xf32>
    %18 = arith.addf %15, %17 : vector<8x128xf32>
    %19 = tpu.transpose %18, [1, 0] : vector<8x128xf32> -> vector<128x8xf32>
    %cst_13 = arith.constant dense<0.000000e+00> : vector<128x256xf32>
    %20 = tpu.matmul %19, %12, %cst_13 {dimension_numbers = #tpu.dot_dimension_numbers<[1], [0], [0], [1], [0, 0, 1, 1], [], []>} : vector<128x8xf32>, vector<8x256xf32>, vector<128x256xf32> -> vector<128x256xf32>
    %cst_14 = arith.constant dense<0xFF800000> : vector<128xf32>
    %21 = vector.multi_reduction <maximumf>, %20, %cst_14 [1] : vector<128x256xf32> to vector<128xf32>
    %22 = vector.shape_cast %21 : vector<128xf32> to vector<128x1xf32>
    %23 = vector.broadcast %22 : vector<128x1xf32> to vector<128x256xf32>
    %24 = arith.subf %20, %23 : vector<128x256xf32>
    %25 = math.exp %24 : vector<128x256xf32>
    %cst_15 = arith.constant dense<0.000000e+00> : vector<128xf32>
    %26 = vector.multi_reduction <add>, %25, %cst_15 [1] : vector<128x256xf32> to vector<128xf32>
    %27 = vector.shape_cast %26 : vector<128xf32> to vector<128x1xf32>
    %28 = tpu.reciprocal %27 {approx = true} : vector<128x1xf32> -> vector<128x1xf32>
    %29 = vector.broadcast %28 : vector<128x1xf32> to vector<128x256xf32>
    %30 = arith.mulf %25, %29 : vector<128x256xf32>
    %cst_16 = arith.constant dense<0.000000e+00> : vector<64x128xf32>
    %31 = tpu.matmul %13, %30, %cst_16 {dimension_numbers = #tpu.dot_dimension_numbers<[1], [1], [0], [0], [0, 0, 1, 0], [], []>} : vector<64x256xf32>, vector<128x256xf32>, vector<64x128xf32> -> vector<64x128xf32>
    %c0_17 = arith.constant 0 : index
    %c0_18 = arith.constant 0 : index
    %32 = memref.load %arg7[%c0_17, %c0_18] : memref<1x1xf32, #tpu.memory_space<smem>>
    %33 = vector.broadcast %32 : f32 to vector<64x128xf32>
    %34 = arith.mulf %33, %31 : vector<64x128xf32>
    %35 = arith.addf %34, %6 : vector<64x128xf32>
    %c0_19 = arith.constant 0 : index
    %c0_20 = arith.constant 0 : index
    %c0_21 = arith.constant 0 : index
    %36 = vector.load %arg8[%c0_19, %c0_20, %c0_21] : memref<1x64x128xf32, #tpu.memory_space<vmem>>, vector<1x64x128xf32>
    %37 = vector.shape_cast %36 : vector<1x64x128xf32> to vector<64x128xf32>
    %38 = vector.shape_cast %35 : vector<64x128xf32> to vector<1x64x128xf32>
    tpu.vector_store %arg8[%c0_19, %c0_20, %c0_21], %38 {strides = array<i32>} : memref<1x64x128xf32, #tpu.memory_space<vmem>>, vector<1x64x128xf32>,
    return
  }
  func.func @transform_0(%arg0: i32, %arg1: i32) -> (i32, i32, i32) {
    %c0_i32 = arith.constant 0 : i32
    %c0_i32_0 = arith.constant 0 : i32
    %c0_i32_1 = arith.constant 0 : i32
    return %arg0, %c0_i32, %c0_i32_0 : i32, i32, i32
  }
  func.func @transform_1(%arg0: i32, %arg1: i32) -> (i32, i32) {
    %c0_i32 = arith.constant 0 : i32
    %c0_i32_0 = arith.constant 0 : i32
    %c0_i32_1 = arith.constant 0 : i32
    return %c0_i32, %c0_i32_0 : i32, i32
  }
  func.func @transform_2(%arg0: i32, %arg1: i32) -> (i32, i32) {
    %c0_i32 = arith.constant 0 : i32
    %c0_i32_0 = arith.constant 0 : i32
    %c0_i32_1 = arith.constant 0 : i32
    return %c0_i32, %c0_i32_0 : i32, i32
  }
  func.func @transform_3(%arg0: i32, %arg1: i32) -> (i32, i32) {
    %c0_i32 = arith.constant 0 : i32
    %c0_i32_0 = arith.constant 0 : i32
    %c0_i32_1 = arith.constant 0 : i32
    return %c0_i32, %c0_i32_0 : i32, i32
  }
  func.func @transform_4(%arg0: i32, %arg1: i32) -> (i32, i32) {
    %c0_i32 = arith.constant 0 : i32
    %c0_i32_0 = arith.constant 0 : i32
    %c0_i32_1 = arith.constant 0 : i32
    return %c0_i32, %c0_i32_0 : i32, i32
  }
  func.func @transform_5(%arg0: i32, %arg1: i32) -> (i32, i32) {
    %c0_i32 = arith.constant 0 : i32
    %c0_i32_0 = arith.constant 0 : i32
    %c0_i32_1 = arith.constant 0 : i32
    return %c0_i32, %c0_i32_0 : i32, i32
  }
  func.func @transform_6(%arg0: i32, %arg1: i32) -> (i32, i32, i32) {
    %c0_i32 = arith.constant 0 : i32
    %c0_i32_0 = arith.constant 0 : i32
    return %arg0, %c0_i32, %arg1 : i32, i32, i32
  }
}

</mosaic_0001>

<llo_original>
// kernel: self_attention_pallas.1
$region0: #{self_attention_pallas.1}
  #allocation0 [shape = 'u32[]', space=smem, size = 0x4, offset = 0x4, fixed_abs, tag = 'smem constant byte address 0x4 - core index']
  #allocation1 [shape = 'u32[144,128]{1,0:T(1,128)}', space=vmem, size = 0x12000, scoped, tag = 'internal scratch']
  #allocation2 [shape = 'f32[1,1]{1,0:T(1,128)S(6)}', space=smem, size = 0x200, scoped, tag = 'scoped memory for self_attention_pallas.1']
  %s0 = inlined_call_operand.vmem [shape: f32[2,64,256], index: 0, kind: input, shape index: {}]
  %s1 = inlined_call_operand.vmem [shape: f32[8,64], index: 1, kind: input, shape index: {}]
  %s2 = inlined_call_operand.vmem [shape: f32[8,1], index: 2, kind: input, shape index: {}]
  %s3 = inlined_call_operand.vmem [shape: f32[72,64], index: 3, kind: input, shape index: {}]
  %s4 = inlined_call_operand.vmem [shape: f32[72,1], index: 4, kind: input, shape index: {}]
  %s5 = inlined_call_operand.<no memory space> [shape: f32[1,1], index: 5, kind: input, shape index: {}]
  %s6 = inlined_call_operand.vmem [shape: f32[2,64,256], index: 6, kind: output, shape index: {}]
  %s7 = sld [smem:[#allocation0]]
  $region91: #{self_attention_pallas.1} parent=0
    _
  %s9 = ssub.s32 1, %s7
  %s10 = scalar_select 0, %s9, %s7
  %11 = sst [smem:[#allocation2]] %s5
  $region1: #{self_attention_pallas.1} parent=0
    #allocation3 [shape = 'u8[65536]{0}', space=vmem, size = 0x10000, scoped, tag = 'output window, operand 0']
    loop: start=0, step=1, limit=6
    $region2: #{self_attention_pallas.1} parent=1 // loop_pre_header
      _
    $region3: #{self_attention_pallas.1} parent=1 // loop_header
      %s13 = sphi 0, %s17
      %p14 = scmp.ge.s32.totalorder %s13, 6
      %s20 = sphi 0, %s32
      %s21 = sphi 0, %s28
      %s22 = sphi 0, %s20
      %s23 = sphi 0, %s21
      %s24 = sphi 0, %s22
      %s25 = sphi 0, %s23
      %s35 = sphi 0, %s37
      %s38 = sphi 0, %s35
      %s39 = sphi 0, %s38
      %s55 = sphi 0, %s39
      %s59 = sphi 0, %s59
      %s61 = sphi 0, %s59
      %s62 = sphi 0, %s61
      %s76 = sphi 0, %s62
      %s80 = sphi 0, %s80
      %s82 = sphi 0, %s80
      %s83 = sphi 0, %s82
      %s97 = sphi 0, %s83
      %s101 = sphi 0, %s101
      %s103 = sphi 0, %s101
      %s104 = sphi 0, %s103
      %s118 = sphi 0, %s104
      %s122 = sphi 0, %s122
      %s124 = sphi 0, %s122
      %s125 = sphi 0, %s124
      %s139 = sphi 0, %s125
      %s143 = sphi 0, %s143
      %s145 = sphi 0, %s143
      %s146 = sphi 0, %s145
      %s160 = sphi 0, %s146
      %s168 = sphi 0, %s170
      %s171 = sphi 0, %s168
      %s172 = sphi 0, %s171
      %s188 = sphi 0, %s172
    $region4: #{self_attention_pallas.1} parent=1 // loop_header_branch
      %16 = sbr.rel (%p14) target = $region8
    $region5: #{self_attention_pallas.1} parent=1 // loop_body
      %s18 = ssub.s32 %s13, 1
      %s19 = ssub.s32 %s13, 2
      %s26 = sadd.s32 1, %s21
      %p27 = scmp.ge.s32.totalorder %s26, 2
      %s28 = scalar_select %p27, 0, %s26
      %s29 = sadd.s32 1, %s20
      %s30 = scalar_select %p27, %s29, %s20
      %p31 = scmp.ge.s32.totalorder %s30, 2
      %s32 = scalar_select %p31, 0, %s30
      %s33 = ssub.s32 %s20, %s32
      %p34 = scmp.eq.s32.totalorder %s33, 0
      %s36 = sadd.s32 %s35, 1
      %s37 = scalar_select %p34, %s35, %s36
      %p40 = pneg %p34
      %p41 = scmp.eq.s32.totalorder %s13, 3
      %p42 = por %p40, %p41
      %p43 = scmp.ne.s32.totalorder %s35, %s38
      %p44 = scmp.eq.s32.totalorder %s13, 0
      %p45 = por %p43, %p44
      %p46 = scmp.ne.s32.totalorder %s35, %s38
      %p47 = scmp.eq.s32.totalorder %s18, 3
      %p48 = por %p46, %p47
      %p49 = scmp.ne.s32.totalorder %s38, %s39
      %p50 = scmp.eq.s32.totalorder %s18, 0
      %p51 = por %p49, %p50
      %p52 = scmp.ne.s32.totalorder %s38, %s39
      %p53 = scmp.eq.s32.totalorder %s19, 3
      %p54 = por %p52, %p53
      %p56 = scmp.ne.s32.totalorder %s39, %s55
      %p57 = scmp.eq.s32.totalorder %s19, 0
      %p58 = por %p56, %p57
      %s60 = sadd.s32 %s59, 1
      %p63 = scmp.eq.s32.totalorder %s13, 3
      %p64 = scmp.ne.s32.totalorder %s59, %s61
      %p65 = scmp.eq.s32.totalorder %s13, 0
      %p66 = por %p64, %p65
      %p67 = scmp.ne.s32.totalorder %s59, %s61
      %p68 = scmp.eq.s32.totalorder %s18, 3
      %p69 = por %p67, %p68
      %p70 = scmp.ne.s32.totalorder %s61, %s62
      %p71 = scmp.eq.s32.totalorder %s18, 0
      %p72 = por %p70, %p71
      %p73 = scmp.ne.s32.totalorder %s61, %s62
      %p74 = scmp.eq.s32.totalorder %s19, 3
      %p75 = por %p73, %p74
      %p77 = scmp.ne.s32.totalorder %s62, %s76
      %p78 = scmp.eq.s32.totalorder %s19, 0
      %p79 = por %p77, %p78
      %s81 = sadd.s32 %s80, 1
      %p84 = scmp.eq.s32.totalorder %s13, 3
      %p85 = scmp.ne.s32.totalorder %s80, %s82
      %p86 = scmp.eq.s32.totalorder %s13, 0
      %p87 = por %p85, %p86
      %p88 = scmp.ne.s32.totalorder %s80, %s82
      %p89 = scmp.eq.s32.totalorder %s18, 3
      %p90 = por %p88, %p89
      %p91 = scmp.ne.s32.totalorder %s82, %s83
      %p92 = scmp.eq.s32.totalorder %s18, 0
      %p93 = por %p91, %p92
      %p94 = scmp.ne.s32.totalorder %s82, %s83
      %p95 = scmp.eq.s32.totalorder %s19, 3
      %p96 = por %p94, %p95
      %p98 = scmp.ne.s32.totalorder %s83, %s97
      %p99 = scmp.eq.s32.totalorder %s19, 0
      %p100 = por %p98, %p99
      %s102 = sadd.s32 %s101, 1
      %p105 = scmp.eq.s32.totalorder %s13, 3
      %p106 = scmp.ne.s32.totalorder %s101, %s103
      %p107 = scmp.eq.s32.totalorder %s13, 0
      %p108 = por %p106, %p107
      %p109 = scmp.ne.s32.totalorder %s101, %s103
      %p110 = scmp.eq.s32.totalorder %s18, 3
      %p111 = por %p109, %p110
      %p112 = scmp.ne.s32.totalorder %s103, %s104
      %p113 = scmp.eq.s32.totalorder %s18, 0
      %p114 = por %p112, %p113
      %p115 = scmp.ne.s32.totalorder %s103, %s104
      %p116 = scmp.eq.s32.totalorder %s19, 3
      %p117 = por %p115, %p116
      %p119 = scmp.ne.s32.totalorder %s104, %s118
      %p120 = scmp.eq.s32.totalorder %s19, 0
      %p121 = por %p119, %p120
      %s123 = sadd.s32 %s122, 1
      %p126 = scmp.eq.s32.totalorder %s13, 3
      %p127 = scmp.ne.s32.totalorder %s122, %s124
      %p128 = scmp.eq.s32.totalorder %s13, 0
      %p129 = por %p127, %p128
      %p130 = scmp.ne.s32.totalorder %s122, %s124
      %p131 = scmp.eq.s32.totalorder %s18, 3
      %p132 = por %p130, %p131
      %p133 = scmp.ne.s32.totalorder %s124, %s125
      %p134 = scmp.eq.s32.totalorder %s18, 0
      %p135 = por %p133, %p134
      %p136 = scmp.ne.s32.totalorder %s124, %s125
      %p137 = scmp.eq.s32.totalorder %s19, 3
      %p138 = por %p136, %p137
      %p140 = scmp.ne.s32.totalorder %s125, %s139
      %p141 = scmp.eq.s32.totalorder %s19, 0
      %p142 = por %p140, %p141
      %s144 = sadd.s32 %s143, 1
      %p147 = scmp.eq.s32.totalorder %s13, 3
      %p148 = scmp.ne.s32.totalorder %s143, %s145
      %p149 = scmp.eq.s32.totalorder %s13, 0
      %p150 = por %p148, %p149
      %p151 = scmp.ne.s32.totalorder %s143, %s145
      %p152 = scmp.eq.s32.totalorder %s18, 3
      %p153 = por %p151, %p152
      %p154 = scmp.ne.s32.totalorder %s145, %s146
      %p155 = scmp.eq.s32.totalorder %s18, 0
      %p156 = por %p154, %p155
      %p157 = scmp.ne.s32.totalorder %s145, %s146
      %p158 = scmp.eq.s32.totalorder %s19, 3
      %p159 = por %p157, %p158
      %p161 = scmp.ne.s32.totalorder %s146, %s160
      %p162 = scmp.eq.s32.totalorder %s19, 0
      %p163 = por %p161, %p162
      %s164 = ssub.s32 %s20, %s32
      %s165 = ssub.s32 %s21, %s28
      %s166 = sor.u32 %s164, %s165
      %p167 = scmp.eq.s32.totalorder %s166, 0
      %s169 = sadd.s32 %s168, 1
      %s170 = scalar_select %p167, %s168, %s169
      %p173 = pneg %p167
      %p174 = scmp.eq.s32.totalorder %s13, 3
      %p175 = por %p173, %p174
      %p176 = scmp.ne.s32.totalorder %s168, %s171
      %p177 = scmp.eq.s32.totalorder %s13, 0
      %p178 = por %p176, %p177
      %p179 = scmp.ne.s32.totalorder %s168, %s171
      %p180 = scmp.eq.s32.totalorder %s18, 3
      %p181 = por %p179, %p180
      %p182 = scmp.ne.s32.totalorder %s171, %s172
      %p183 = scmp.eq.s32.totalorder %s18, 0
      %p184 = por %p182, %p183
      %p185 = scmp.ne.s32.totalorder %s171, %s172
      %p186 = scmp.eq.s32.totalorder %s19, 3
      %p187 = por %p185, %p186
      %p189 = scmp.ne.s32.totalorder %s172, %s188
      %p190 = scmp.eq.s32.totalorder %s19, 0
      %p191 = por %p189, %p190
      %p192 = scmp.le.s32.totalorder 1, %s13
      %p193 = scmp.lt.s32.totalorder %s13, 5
      %p194 = pnand %p192, %p193
      %p195 = pneg %p194
      // Predicated region
      $region9: #{self_attention_pallas.1} parent=5 // pred_check
        _
      $region10: #{self_attention_pallas.1} parent=5 // pred_check_branch
        %197 = sbr.rel (%p194) target = $region12
      $region11: #{self_attention_pallas.1} parent=5 // pred_region
        %s198 = ssub.s32 %s13, 1
        // Predicated region
        $region13: #{self_attention_pallas.1} parent=11 // pred_check
          %p199 = pneg %p72
        $region14: #{self_attention_pallas.1} parent=11 // pred_check_branch
          %201 = sbr.rel (%p199) target = $region16
        $region15: #{self_attention_pallas.1} parent=11 // pred_region
          _
        $region16: #{self_attention_pallas.1} parent=11 // pred_fallthru
          _
        // Predicated region
        $region17: #{self_attention_pallas.1} parent=11 // pred_check
          %p202 = pneg %p93
        $region18: #{self_attention_pallas.1} parent=11 // pred_check_branch
          %204 = sbr.rel (%p202) target = $region20
        $region19: #{self_attention_pallas.1} parent=11 // pred_region
          _
        $region20: #{self_attention_pallas.1} parent=11 // pred_fallthru
          _
        // Predicated region
        $region21: #{self_attention_pallas.1} parent=11 // pred_check
          %p205 = pneg %p114
        $region22: #{self_attention_pallas.1} parent=11 // pred_check_branch
          %207 = sbr.rel (%p205) target = $region24
        $region23: #{self_attention_pallas.1} parent=11 // pred_region
          _
        $region24: #{self_attention_pallas.1} parent=11 // pred_fallthru
          _
        // Predicated region
        $region25: #{self_attention_pallas.1} parent=11 // pred_check
          %p208 = pneg %p135
        $region26: #{self_attention_pallas.1} parent=11 // pred_check_branch
          %210 = sbr.rel (%p208) target = $region28
        $region27: #{self_attention_pallas.1} parent=11 // pred_region
          _
        $region28: #{self_attention_pallas.1} parent=11 // pred_fallthru
          _
        // Predicated region
        $region29: #{self_attention_pallas.1} parent=11 // pred_check
          %p211 = pneg %p156
        $region30: #{self_attention_pallas.1} parent=11 // pred_check_branch
          %213 = sbr.rel (%p211) target = $region32
        $region31: #{self_attention_pallas.1} parent=11 // pred_region
          _
        $region32: #{self_attention_pallas.1} parent=11 // pred_fallthru
          _
      $region12: #{self_attention_pallas.1} parent=5 // pred_fallthru
        _
      %p214 = scmp.lt.s32.totalorder %s13, 4
      // Predicated region
      $region33: #{self_attention_pallas.1} parent=5 // pred_check
        %p215 = pneg %p214
      $region34: #{self_attention_pallas.1} parent=5 // pred_check_branch
        %217 = sbr.rel (%p215) target = $region36
      $region35: #{self_attention_pallas.1} parent=5 // pred_region
        // Predicated region
        $region37: #{self_attention_pallas.1} parent=35 // pred_check
          %p218 = pneg %p45
        $region38: #{self_attention_pallas.1} parent=35 // pred_check_branch
          %220 = sbr.rel (%p218) target = $region40
        $region39: #{self_attention_pallas.1} parent=35 // pred_region
          %p221 = scmp.lt.s32.totalorder %s20, 1
          %s222 = scalar_select %p221, %s20, 1
          %s223 = smul.addr %s222, 16
          %s224 = smul.addr %s223, 8
          %s225 = scalar_lea.vmem %s0, %s224
        $region40: #{self_attention_pallas.1} parent=35 // pred_fallthru
          _
      $region36: #{self_attention_pallas.1} parent=5 // pred_fallthru
        _
      %p226 = scmp.le.s32.totalorder 1, %s13
      %p227 = scmp.lt.s32.totalorder %s13, 5
      %p228 = pnand %p226, %p227
      %p229 = pneg %p228
      // Predicated region
      $region41: #{self_attention_pallas.1} parent=5 // pred_check
        _
      $region42: #{self_attention_pallas.1} parent=5 // pred_check_branch
        %231 = sbr.rel (%p228) target = $region44
      $region43: #{self_attention_pallas.1} parent=5 // pred_region
        %s232 = ssub.s32 %s13, 1
        %p233 = scmp.lt.s32.totalorder %s22, 1
        %s234 = scalar_select %p233, %s22, 1
        %s235 = smul.addr %s234, 16
        %s236 = smul.addr %s235, 8
        %s237 = scalar_lea.vmem %s0, %s236
        %p238 = pneg %p51
        %p239 = pneg %p48
        %p240 = pneg %p72
        %p241 = pneg %p69
        %p242 = pneg %p93
        %p243 = pneg %p90
        %p244 = pneg %p114
        %p245 = pneg %p111
        %p246 = pneg %p135
        %p247 = pneg %p132
        %p248 = pneg %p156
        %p249 = pneg %p153
        %p250 = pneg %p184
        %p251 = pneg %p181
        %s252 = sand.u32 %s171, 1
        %s253 = sand.u32 %s171, 1
        %s254 = smul.addr %s253, 64
        %s255 = scalar_lea.vmem [#allocation3], %s254
        %p256 = scmp.lt.s32.totalorder %s22, 1
        %s257 = scalar_select %p256, %s22, 1
        %s258 = smul.addr %s257, 16
        %s259 = smul.addr %s258, 8
        %s260 = scalar_lea.vmem %s0, %s259
        %s261 = smul.u32 %s23, 128
        %v262 = vld [vmem:[%s260] sm:$0xff]
        %v263 = vld [vmem:[%s260 + $0x8] sm:$0xff]
        %v264 = vld [vmem:[%s260 + $0x10] sm:$0xff]
        %v265 = vld [vmem:[%s260 + $0x18] sm:$0xff]
        %v266 = vld [vmem:[%s260 + $0x20] sm:$0xff]
        %v267 = vld [vmem:[%s260 + $0x28] sm:$0xff]
        %v268 = vld [vmem:[%s260 + $0x30] sm:$0xff]
        %v269 = vld [vmem:[%s260 + $0x38] sm:$0xff]
        %v270 = vld [vmem:[%s260 + $0x40] sm:$0xff]
        %v271 = vld [vmem:[%s260 + $0x48] sm:$0xff]
        %v272 = vld [vmem:[%s260 + $0x50] sm:$0xff]
        %v273 = vld [vmem:[%s260 + $0x58] sm:$0xff]
        %v274 = vld [vmem:[%s260 + $0x60] sm:$0xff]
        %v275 = vld [vmem:[%s260 + $0x68] sm:$0xff]
        %v276 = vld [vmem:[%s260 + $0x70] sm:$0xff]
        %v277 = vld [vmem:[%s260 + $0x78] sm:$0xff]
        %s278 = sshra.s32 %s261, 7
        %s279 = sand.u32 %s261, 127
        %s280 = smul.addr %s278, 8
        %s281 = scalar_lea.vmem %s260, %s280
        %v282 = vld [vmem:[%s281] sm:$0xff]
        %v283 = vld [vmem:[%s281 + $0x10] sm:$0xff]
        %v284 = vld [vmem:[%s281 + $0x20] sm:$0xff]
        %v285 = vld [vmem:[%s281 + $0x30] sm:$0xff]
        %v286 = vld [vmem:[%s281 + $0x40] sm:$0xff]
        %v287 = vld [vmem:[%s281 + $0x50] sm:$0xff]
        %v288 = vld [vmem:[%s281 + $0x60] sm:$0xff]
        %v289 = vld [vmem:[%s281 + $0x70] sm:$0xff]
        %v290 = vld [vmem:[%s3] sm:$0xff]
        %v291 = vld [vmem:[%s3 + $0x8] sm:$0xff]
        %v292 = vld [vmem:[%s3 + $0x10] sm:$0xff]
        %v293 = vld [vmem:[%s3 + $0x18] sm:$0xff]
        %v294 = vld [vmem:[%s3 + $0x20] sm:$0xff]
        %v295 = vld [vmem:[%s3 + $0x28] sm:$0xff]
        %v296 = vld [vmem:[%s3 + $0x30] sm:$0xff]
        %v297 = vld [vmem:[%s3 + $0x38] sm:$0xff]
        %v298 = vld [vmem:[%s3 + $0x40] sm:$0xff]
        %v299 = vld [vmem:[%s4] sm:$0xff]
        %v300 = vld [vmem:[%s4 + $0x8] sm:$0xff]
        %v301 = vld [vmem:[%s4 + $0x10] sm:$0xff]
        %v302 = vld [vmem:[%s4 + $0x18] sm:$0xff]
        %v303 = vld [vmem:[%s4 + $0x20] sm:$0xff]
        %v304 = vld [vmem:[%s4 + $0x28] sm:$0xff]
        %v305 = vld [vmem:[%s4 + $0x30] sm:$0xff]
        %v306 = vld [vmem:[%s4 + $0x38] sm:$0xff]
        %v307 = vld [vmem:[%s4 + $0x40] sm:$0xff]
        %309 = vset.pattern.permute.xlu0 0
        %310 = vperm.xlu0 %309, %v299
        %v311 = vpop.permute.xlu0 %310
        %314 = vset.pattern.permute.xlu0 0
        %315 = vperm.xlu0 %314, %v300
        %v316 = vpop.permute.xlu0 %315
        %319 = vset.pattern.permute.xlu0 0
        %320 = vperm.xlu0 %319, %v301
        %v321 = vpop.permute.xlu0 %320
        %324 = vset.pattern.permute.xlu0 0
        %325 = vperm.xlu0 %324, %v302
        %v326 = vpop.permute.xlu0 %325
        %329 = vset.pattern.permute.xlu0 0
        %330 = vperm.xlu0 %329, %v303
        %v331 = vpop.permute.xlu0 %330
        %334 = vset.pattern.permute.xlu0 0
        %335 = vperm.xlu0 %334, %v304
        %v336 = vpop.permute.xlu0 %335
        %339 = vset.pattern.permute.xlu0 0
        %340 = vperm.xlu0 %339, %v305
        %v341 = vpop.permute.xlu0 %340
        %344 = vset.pattern.permute.xlu0 0
        %345 = vperm.xlu0 %344, %v306
        %v346 = vpop.permute.xlu0 %345
        %349 = vset.pattern.permute.xlu0 0
        %350 = vperm.xlu0 %349, %v307
        %v351 = vpop.permute.xlu0 %350
        %vm353 = vcmask 523264
        %v355 = vsel %vm353, %v290, 0
        %v358 = vsel %vm353, %v291, 0
        %v361 = vsel %vm353, %v292, 0
        %v364 = vsel %vm353, %v293, 0
        %v367 = vsel %vm353, %v294, 0
        %v370 = vsel %vm353, %v295, 0
        %v373 = vsel %vm353, %v296, 0
        %v376 = vsel %vm353, %v297, 0
        %v379 = vsel %vm353, %v298, 0
        %381 = vmatprep.subr.mxu0 %v263
        %382 = vmatpush1.msra.mxu0 %v262
        %383 = vmatprep.subr.mxu0 %v265
        %384 = vmatpush1.msra.mxu0 %v264
        %385 = vmatprep.subr.mxu0 %v267
        %386 = vmatpush1.msra.mxu0 %v266
        %387 = vmatprep.subr.mxu0 %v269
        %388 = vmatpush1.msra.mxu0 %v268
        %389 = vmatprep.subr.mxu0 %v271
        %390 = vmatpush1.msra.mxu0 %v270
        %391 = vmatprep.subr.mxu0 %v273
        %392 = vmatpush1.msra.mxu0 %v272
        %393 = vmatprep.subr.mxu0 %v275
        %394 = vmatpush1.msra.mxu0 %v274
        %395 = vmatprep.subr.mxu0 %v277
        %396 = vmatpush1.msra.mxu0 %v276
        %397 = vmatprep.subr.mxu0 0.0
        %398 = vmatpush1.msra.mxu0 0.0
        %399 = vmatprep.subr.mxu0 0.0
        %400 = vmatpush1.msra.mxu0 0.0
        %401 = vmatprep.subr.mxu0 0.0
        %402 = vmatpush1.msra.mxu0 0.0
        %403 = vmatprep.subr.mxu0 0.0
        %404 = vmatpush1.msra.mxu0 0.0
        %405 = vmatprep.subr.mxu0 0.0
        %406 = vmatpush1.msra.mxu0 0.0
        %407 = vmatprep.subr.mxu0 0.0
        %408 = vmatpush1.msra.mxu0 0.0
        %409 = vmatprep.subr.mxu0 0.0
        %410 = vmatpush1.msra.mxu0 0.0
        %411 = vmatprep.subr.mxu0 0.0
        %412 = vmatpush1.msra.mxu0 0.0
        %413 = vmatprep.subr.mxu0 0.0
        %414 = vmatpush1.msra.mxu0 0.0
        %415 = vmatprep.subr.mxu0 0.0
        %416 = vmatpush1.msra.mxu0 0.0
        %417 = vmatprep.subr.mxu0 0.0
        %418 = vmatpush1.msra.mxu0 0.0
        %419 = vmatprep.subr.mxu0 0.0
        %420 = vmatpush1.msra.mxu0 0.0
        %421 = vmatprep.subr.mxu0 0.0
        %422 = vmatpush1.msra.mxu0 0.0
        %423 = vmatprep.subr.mxu0 0.0
        %424 = vmatpush1.msra.mxu0 0.0
        %425 = vmatprep.subr.mxu0 0.0
        %426 = vmatpush1.msra.mxu0 0.0
        %427 = vmatprep.subr.mxu0 0.0
        %428 = vmatpush1.msra.mxu0 0.0
        %429 = vmatprep.subr.mxu0 0.0
        %430 = vmatpush1.msra.mxu0 0.0
        %431 = vmatprep.subr.mxu0 0.0
        %432 = vmatpush1.msra.mxu0 0.0
        %433 = vmatprep.subr.mxu0 0.0
        %434 = vmatpush1.msra.mxu0 0.0
        %435 = vmatprep.subr.mxu0 0.0
        %436 = vmatpush1.msra.mxu0 0.0
        %437 = vmatprep.subr.mxu0 0.0
        %438 = vmatpush1.msra.mxu0 0.0
        %439 = vmatprep.subr.mxu0 0.0
        %440 = vmatpush1.msra.mxu0 0.0
        %441 = vmatprep.subr.mxu0 0.0
        %442 = vmatpush1.msra.mxu0 0.0
        %443 = vmatprep.subr.mxu0 0.0
        %444 = vmatpush1.msra.mxu0 0.0
        %445 = vmatprep.mubr.f32.mxu0 0.0
        %446 = vmatmul.mubr.f32.gmra.mrb[0].mxu0 %v355
        %v447 = vpop.f32.mrb[0].mxu0
        %v448 = vadd.f32 %v311, %v447
        %v449 = vpop.f32.mrb[0].mxu0
        %v450 = vadd.f32 %v311, %v449
        %451 = vmatprep.mubr.f32.mxu0 0.0
        %452 = vmatmul.mubr.f32.gmra.mrb[0].mxu0 %v358
        %v453 = vpop.f32.mrb[0].mxu0
        %v454 = vadd.f32 %v316, %v453
        %v455 = vpop.f32.mrb[0].mxu0
        %v456 = vadd.f32 %v316, %v455
        %457 = vmatprep.mubr.f32.mxu0 0.0
        %458 = vmatmul.mubr.f32.gmra.mrb[0].mxu0 %v361
        %v459 = vpop.f32.mrb[0].mxu0
        %v460 = vadd.f32 %v321, %v459
        %v461 = vpop.f32.mrb[0].mxu0
        %v462 = vadd.f32 %v321, %v461
        %463 = vmatprep.mubr.f32.mxu0 0.0
        %464 = vmatmul.mubr.f32.gmra.mrb[0].mxu0 %v364
        %v465 = vpop.f32.mrb[0].mxu0
        %v466 = vadd.f32 %v326, %v465
        %v467 = vpop.f32.mrb[0].mxu0
        %v468 = vadd.f32 %v326, %v467
        %469 = vmatprep.mubr.f32.mxu0 0.0
        %470 = vmatmul.mubr.f32.gmra.mrb[0].mxu0 %v367
        %v471 = vpop.f32.mrb[0].mxu0
        %v472 = vadd.f32 %v331, %v471
        %v473 = vpop.f32.mrb[0].mxu0
        %v474 = vadd.f32 %v331, %v473
        %475 = vmatprep.mubr.f32.mxu0 0.0
        %476 = vmatmul.mubr.f32.gmra.mrb[0].mxu0 %v370
        %v477 = vpop.f32.mrb[0].mxu0
        %v478 = vadd.f32 %v336, %v477
        %v479 = vpop.f32.mrb[0].mxu0
        %v480 = vadd.f32 %v336, %v479
        %481 = vmatprep.mubr.f32.mxu0 0.0
        %482 = vmatmul.mubr.f32.gmra.mrb[0].mxu0 %v373
        %v483 = vpop.f32.mrb[0].mxu0
        %v484 = vadd.f32 %v341, %v483
        %v485 = vpop.f32.mrb[0].mxu0
        %v486 = vadd.f32 %v341, %v485
        %487 = vmatprep.mubr.f32.mxu0 0.0
        %488 = vmatmul.mubr.f32.gmra.mrb[0].mxu0 %v376
        %v489 = vpop.f32.mrb[0].mxu0
        %v490 = vadd.f32 %v346, %v489
        %v491 = vpop.f32.mrb[0].mxu0
        %v492 = vadd.f32 %v346, %v491
        %493 = vmatprep.mubr.f32.mxu0 0.0
        %494 = vmatmul.mubr.f32.gmra.mrb[0].mxu0 %v379
        %v495 = vpop.f32.mrb[0].mxu0
        %v496 = vadd.f32 %v351, %v495
        %v497 = vpop.f32.mrb[0].mxu0
        %v498 = vadd.f32 %v351, %v497
        %499 = vdwg.mxu0
        %v500 = vld [vmem:[%s1] sm:$0xff]
        %v501 = vld [vmem:[%s2] sm:$0xff]
        %503 = vset.pattern.permute.xlu0 0
        %504 = vperm.xlu0 %503, %v501
        %v505 = vpop.permute.xlu0 %504
        %v508 = vsel %vm353, %v500, 0
        %510 = vmatprep.subr.mxu0 0.0
        %511 = vmatpush1.msra.mxu0 %v282
        %512 = vmatprep.subr.mxu0 0.0
        %513 = vmatpush1.msra.mxu0 %v283
        %514 = vmatprep.subr.mxu0 0.0
        %515 = vmatpush1.msra.mxu0 %v284
        %516 = vmatprep.subr.mxu0 0.0
        %517 = vmatpush1.msra.mxu0 %v285
        %518 = vmatprep.subr.mxu0 0.0
        %519 = vmatpush1.msra.mxu0 %v286
        %520 = vmatprep.subr.mxu0 0.0
        %521 = vmatpush1.msra.mxu0 %v287
        %522 = vmatprep.subr.mxu0 0.0
        %523 = vmatpush1.msra.mxu0 %v288
        %524 = vmatprep.subr.mxu0 0.0
        %525 = vmatpush1.msra.mxu0 %v289
        %526 = vmatprep.subr.mxu0 0.0
        %527 = vmatpush1.msra.mxu0 0.0
        %528 = vmatprep.subr.mxu0 0.0
        %529 = vmatpush1.msra.mxu0 0.0
        %530 = vmatprep.subr.mxu0 0.0
        %531 = vmatpush1.msra.mxu0 0.0
        %532 = vmatprep.subr.mxu0 0.0
        %533 = vmatpush1.msra.mxu0 0.0
        %534 = vmatprep.subr.mxu0 0.0
        %535 = vmatpush1.msra.mxu0 0.0
        %536 = vmatprep.subr.mxu0 0.0
        %537 = vmatpush1.msra.mxu0 0.0
        %538 = vmatprep.subr.mxu0 0.0
        %539 = vmatpush1.msra.mxu0 0.0
        %540 = vmatprep.subr.mxu0 0.0
        %541 = vmatpush1.msra.mxu0 0.0
        %542 = vmatprep.subr.mxu0 0.0
        %543 = vmatpush1.msra.mxu0 0.0
        %544 = vmatprep.subr.mxu0 0.0
        %545 = vmatpush1.msra.mxu0 0.0
        %546 = vmatprep.subr.mxu0 0.0
        %547 = vmatpush1.msra.mxu0 0.0
        %548 = vmatprep.subr.mxu0 0.0
        %549 = vmatpush1.msra.mxu0 0.0
        %550 = vmatprep.subr.mxu0 0.0
        %551 = vmatpush1.msra.mxu0 0.0
        %552 = vmatprep.subr.mxu0 0.0
        %553 = vmatpush1.msra.mxu0 0.0
        %554 = vmatprep.subr.mxu0 0.0
        %555 = vmatpush1.msra.mxu0 0.0
        %556 = vmatprep.subr.mxu0 0.0
        %557 = vmatpush1.msra.mxu0 0.0
        %558 = vmatprep.subr.mxu0 0.0
        %559 = vmatpush1.msra.mxu0 0.0
        %560 = vmatprep.subr.mxu0 0.0
        %561 = vmatpush1.msra.mxu0 0.0
        %562 = vmatprep.subr.mxu0 0.0
        %563 = vmatpush1.msra.mxu0 0.0
        %564 = vmatprep.subr.mxu0 0.0
        %565 = vmatpush1.msra.mxu0 0.0
        %566 = vmatprep.subr.mxu0 0.0
        %567 = vmatpush1.msra.mxu0 0.0
        %568 = vmatprep.subr.mxu0 0.0
        %569 = vmatpush1.msra.mxu0 0.0
        %570 = vmatprep.subr.mxu0 0.0
        %571 = vmatpush1.msra.mxu0 0.0
        %572 = vmatprep.subr.mxu0 0.0
        %573 = vmatpush1.msra.mxu0 0.0
        %574 = vmatprep.mubr.f32.mxu0 0.0
        %575 = vmatmul.mubr.f32.gmra.mrb[0].mxu0 %v508
        %v576 = vpop.f32.mrb[0].mxu0
        %v577 = vadd.f32 %v505, %v576
        %v578 = vpop.f32.mrb[0].mxu0
        %579 = vdwg.mxu0
        %580 = vxpose.xlu0.b32.start [1/16] %v577, 128
        %581 = vxpose.xlu0.b32.cont [2/16] 0.0, 128
        %582 = vxpose.xlu0.b32.cont [3/16] 0.0, 128
        %583 = vxpose.xlu0.b32.cont [4/16] 0.0, 128
        %584 = vxpose.xlu0.b32.cont [5/16] 0.0, 128
        %585 = vxpose.xlu0.b32.cont [6/16] 0.0, 128
        %586 = vxpose.xlu0.b32.cont [7/16] 0.0, 128
        %587 = vxpose.xlu0.b32.cont [8/16] 0.0, 128
        %588 = vxpose.xlu0.b32.cont [9/16] 0.0, 128
        %589 = vxpose.xlu0.b32.cont [10/16] 0.0, 128
        %590 = vxpose.xlu0.b32.cont [11/16] 0.0, 128
        %591 = vxpose.xlu0.b32.cont [12/16] 0.0, 128
        %592 = vxpose.xlu0.b32.cont [13/16] 0.0, 128
        %593 = vxpose.xlu0.b32.cont [14/16] 0.0, 128
        %594 = vxpose.xlu0.b32.cont [15/16] 0.0, 128
        %595 = vxpose.xlu0.b32.end [16/16] 0.0, 128
        %v596 = vpop.trf.xlu0
        %v597 = vpop.trf.xlu0
        %v598 = vpop.trf.xlu0
        %v599 = vpop.trf.xlu0
        %v600 = vpop.trf.xlu0
        %v601 = vpop.trf.xlu0
        %v602 = vpop.trf.xlu0
        %v603 = vpop.trf.xlu0
        %v604 = vpop.trf.xlu0
        %v605 = vpop.trf.xlu0
        %v606 = vpop.trf.xlu0
        %v607 = vpop.trf.xlu0
        %v608 = vpop.trf.xlu0
        %v609 = vpop.trf.xlu0
        %v610 = vpop.trf.xlu0
        %v611 = vpop.trf.xlu0
        %vm612 = vcmask 64512
        %v614 = vsel %vm612, %v596, 0
        %v617 = vsel %vm612, %v597, 0
        %v620 = vsel %vm612, %v598, 0
        %v623 = vsel %vm612, %v599, 0
        %v626 = vsel %vm612, %v600, 0
        %v629 = vsel %vm612, %v601, 0
        %v632 = vsel %vm612, %v602, 0
        %v635 = vsel %vm612, %v603, 0
        %v638 = vsel %vm612, %v604, 0
        %v641 = vsel %vm612, %v605, 0
        %v644 = vsel %vm612, %v606, 0
        %v647 = vsel %vm612, %v607, 0
        %v650 = vsel %vm612, %v608, 0
        %v653 = vsel %vm612, %v609, 0
        %v656 = vsel %vm612, %v610, 0
        %v659 = vsel %vm612, %v611, 0
        %661 = vmatprep.subr.mxu0 %v450
        %662 = vmatpush1.msra.mxu0 %v448
        %663 = vmatprep.subr.mxu0 0.0
        %664 = vmatpush1.msra.mxu0 0.0
        %665 = vmatprep.subr.mxu0 0.0
        %666 = vmatpush1.msra.mxu0 0.0
        %667 = vmatprep.subr.mxu0 0.0
        %668 = vmatpush1.msra.mxu0 0.0
        %669 = vmatprep.subr.mxu0 0.0
        %670 = vmatpush1.msra.mxu0 0.0
        %671 = vmatprep.subr.mxu0 0.0
        %672 = vmatpush1.msra.mxu0 0.0
        %673 = vmatprep.subr.mxu0 0.0
        %674 = vmatpush1.msra.mxu0 0.0
        %675 = vmatprep.subr.mxu0 0.0
        %676 = vmatpush1.msra.mxu0 0.0
        %677 = vmatprep.subr.mxu0 0.0
        %678 = vmatpush1.msra.mxu0 0.0
        %679 = vmatprep.subr.mxu0 0.0
        %680 = vmatpush1.msra.mxu0 0.0
        %681 = vmatprep.subr.mxu0 0.0
        %682 = vmatpush1.msra.mxu0 0.0
        %683 = vmatprep.subr.mxu0 0.0
        %684 = vmatpush1.msra.mxu0 0.0
        %685 = vmatprep.subr.mxu0 0.0
        %686 = vmatpush1.msra.mxu0 0.0
        %687 = vmatprep.subr.mxu0 0.0
        %688 = vmatpush1.msra.mxu0 0.0
        %689 = vmatprep.subr.mxu0 0.0
        %690 = vmatpush1.msra.mxu0 0.0
        %691 = vmatprep.subr.mxu0 0.0
        %692 = vmatpush1.msra.mxu0 0.0
        %693 = vmatprep.subr.mxu0 0.0
        %694 = vmatpush1.msra.mxu0 0.0
        %695 = vmatprep.subr.mxu0 0.0
        %696 = vmatpush1.msra.mxu0 0.0
        %697 = vmatprep.subr.mxu0 0.0
        %698 = vmatpush1.msra.mxu0 0.0
        %699 = vmatprep.subr.mxu0 0.0
        %700 = vmatpush1.msra.mxu0 0.0
        %701 = vmatprep.subr.mxu0 0.0
        %702 = vmatpush1.msra.mxu0 0.0
        %703 = vmatprep.subr.mxu0 0.0
        %704 = vmatpush1.msra.mxu0 0.0
        %705 = vmatprep.subr.mxu0 0.0
        %706 = vmatpush1.msra.mxu0 0.0
        %707 = vmatprep.subr.mxu0 0.0
        %708 = vmatpush1.msra.mxu0 0.0
        %709 = vmatprep.subr.mxu0 0.0
        %710 = vmatpush1.msra.mxu0 0.0
        %711 = vmatprep.subr.mxu0 0.0
        %712 = vmatpush1.msra.mxu0 0.0
        %713 = vmatprep.subr.mxu0 0.0
        %714 = vmatpush1.msra.mxu0 0.0
        %715 = vmatprep.subr.mxu0 0.0
        %716 = vmatpush1.msra.mxu0 0.0
        %717 = vmatprep.subr.mxu0 0.0
        %718 = vmatpush1.msra.mxu0 0.0
        %719 = vmatprep.subr.mxu0 0.0
        %720 = vmatpush1.msra.mxu0 0.0
        %721 = vmatprep.subr.mxu0 0.0
        %722 = vmatpush1.msra.mxu0 0.0
        %723 = vmatprep.subr.mxu0 0.0
        %724 = vmatpush1.msra.mxu0 0.0
        %725 = vmatprep.mubr.f32.mxu0 0.0
        %726 = vmatmul.mubr.f32.gmra.mrb[0].mxu0 %v614
        %v727 = vpop.f32.mrb[0].mxu0
        %v728 = vadd.f32 0.0, %v727
        %v729 = vpop.f32.mrb[0].mxu0
        %v730 = vadd.f32 0.0, %v729
        %731 = vmatprep.mubr.f32.mxu0 0.0
        %732 = vmatmul.mubr.f32.gmra.mrb[0].mxu0 %v617
        %v733 = vpop.f32.mrb[0].mxu0
        %v734 = vadd.f32 0.0, %v733
        %v735 = vpop.f32.mrb[0].mxu0
        %v736 = vadd.f32 0.0, %v735
        %737 = vmatprep.mubr.f32.mxu0 0.0
        %738 = vmatmul.mubr.f32.gmra.mrb[0].mxu0 %v620
        %v739 = vpop.f32.mrb[0].mxu0
        %v740 = vadd.f32 0.0, %v739
        %v741 = vpop.f32.mrb[0].mxu0
        %v742 = vadd.f32 0.0, %v741
        %743 = vmatprep.mubr.f32.mxu0 0.0
        %744 = vmatmul.mubr.f32.gmra.mrb[0].mxu0 %v623
        %v745 = vpop.f32.mrb[0].mxu0
        %v746 = vadd.f32 0.0, %v745
        %v747 = vpop.f32.mrb[0].mxu0
        %v748 = vadd.f32 0.0, %v747
        %749 = vmatprep.mubr.f32.mxu0 0.0
        %750 = vmatmul.mubr.f32.gmra.mrb[0].mxu0 %v626
        %v751 = vpop.f32.mrb[0].mxu0
        %v752 = vadd.f32 0.0, %v751
        %v753 = vpop.f32.mrb[0].mxu0
        %v754 = vadd.f32 0.0, %v753
        %755 = vmatprep.mubr.f32.mxu0 0.0
        %756 = vmatmul.mubr.f32.gmra.mrb[0].mxu0 %v629
        %v757 = vpop.f32.mrb[0].mxu0
        %v758 = vadd.f32 0.0, %v757
        %v759 = vpop.f32.mrb[0].mxu0
        %v760 = vadd.f32 0.0, %v759
        %761 = vmatprep.mubr.f32.mxu0 0.0
        %762 = vmatmul.mubr.f32.gmra.mrb[0].mxu0 %v632
        %v763 = vpop.f32.mrb[0].mxu0
        %v764 = vadd.f32 0.0, %v763
        %v765 = vpop.f32.mrb[0].mxu0
        %v766 = vadd.f32 0.0, %v765
        %767 = vmatprep.mubr.f32.mxu0 0.0
        %768 = vmatmul.mubr.f32.gmra.mrb[0].mxu0 %v635
        %v769 = vpop.f32.mrb[0].mxu0
        %v770 = vadd.f32 0.0, %v769
        %v771 = vpop.f32.mrb[0].mxu0
        %v772 = vadd.f32 0.0, %v771
        %773 = vmatprep.mubr.f32.mxu0 0.0
        %774 = vmatmul.mubr.f32.gmra.mrb[0].mxu0 %v638
        %v775 = vpop.f32.mrb[0].mxu0
        %v776 = vadd.f32 0.0, %v775
        %v777 = vpop.f32.mrb[0].mxu0
        %v778 = vadd.f32 0.0, %v777
        %779 = vmatprep.mubr.f32.mxu0 0.0
        %780 = vmatmul.mubr.f32.gmra.mrb[0].mxu0 %v641
        %v781 = vpop.f32.mrb[0].mxu0
        %v782 = vadd.f32 0.0, %v781
        %v783 = vpop.f32.mrb[0].mxu0
        %v784 = vadd.f32 0.0, %v783
        %785 = vmatprep.mubr.f32.mxu0 0.0
        %786 = vmatmul.mubr.f32.gmra.mrb[0].mxu0 %v644
        %v787 = vpop.f32.mrb[0].mxu0
        %v788 = vadd.f32 0.0, %v787
        %v789 = vpop.f32.mrb[0].mxu0
        %v790 = vadd.f32 0.0, %v789
        %791 = vmatprep.mubr.f32.mxu0 0.0
        %792 = vmatmul.mubr.f32.gmra.mrb[0].mxu0 %v647
        %v793 = vpop.f32.mrb[0].mxu0
        %v794 = vadd.f32 0.0, %v793
        %v795 = vpop.f32.mrb[0].mxu0
        %v796 = vadd.f32 0.0, %v795
        %797 = vmatprep.mubr.f32.mxu0 0.0
        %798 = vmatmul.mubr.f32.gmra.mrb[0].mxu0 %v650
        %v799 = vpop.f32.mrb[0].mxu0
        %v800 = vadd.f32 0.0, %v799
        %v801 = vpop.f32.mrb[0].mxu0
        %v802 = vadd.f32 0.0, %v801
        %803 = vmatprep.mubr.f32.mxu0 0.0
        %804 = vmatmul.mubr.f32.gmra.mrb[0].mxu0 %v653
        %v805 = vpop.f32.mrb[0].mxu0
        %v806 = vadd.f32 0.0, %v805
        %v807 = vpop.f32.mrb[0].mxu0
        %v808 = vadd.f32 0.0, %v807
        %809 = vmatprep.mubr.f32.mxu0 0.0
        %810 = vmatmul.mubr.f32.gmra.mrb[0].mxu0 %v656
        %v811 = vpop.f32.mrb[0].mxu0
        %v812 = vadd.f32 0.0, %v811
        %v813 = vpop.f32.mrb[0].mxu0
        %v814 = vadd.f32 0.0, %v813
        %815 = vmatprep.mubr.f32.mxu0 0.0
        %816 = vmatmul.mubr.f32.gmra.mrb[0].mxu0 %v659
        %v817 = vpop.f32.mrb[0].mxu0
        %v818 = vadd.f32 0.0, %v817
        %v819 = vpop.f32.mrb[0].mxu0
        %v820 = vadd.f32 0.0, %v819
        %821 = vdwg.mxu0
        %v822 = vmax.f32 %v728, %v730
        %823 = vmax.xlane.f32.xlu0 %v822
        %v824 = vpop.xlane.xlu0 %823
        %v825 = vmax.f32 %v734, %v736
        %826 = vmax.xlane.f32.xlu0 %v825
        %v827 = vpop.xlane.xlu0 %826
        %v828 = vmax.f32 %v740, %v742
        %829 = vmax.xlane.f32.xlu0 %v828
        %v830 = vpop.xlane.xlu0 %829
        %v831 = vmax.f32 %v746, %v748
        %832 = vmax.xlane.f32.xlu0 %v831
        %v833 = vpop.xlane.xlu0 %832
        %v834 = vmax.f32 %v752, %v754
        %835 = vmax.xlane.f32.xlu0 %v834
        %v836 = vpop.xlane.xlu0 %835
        %v837 = vmax.f32 %v758, %v760
        %838 = vmax.xlane.f32.xlu0 %v837
        %v839 = vpop.xlane.xlu0 %838
        %v840 = vmax.f32 %v764, %v766
        %841 = vmax.xlane.f32.xlu0 %v840
        %v842 = vpop.xlane.xlu0 %841
        %v843 = vmax.f32 %v770, %v772
        %844 = vmax.xlane.f32.xlu0 %v843
        %v845 = vpop.xlane.xlu0 %844
        %v846 = vmax.f32 %v776, %v778
        %847 = vmax.xlane.f32.xlu0 %v846
        %v848 = vpop.xlane.xlu0 %847
        %v849 = vmax.f32 %v782, %v784
        %850 = vmax.xlane.f32.xlu0 %v849
        %v851 = vpop.xlane.xlu0 %850
        %v852 = vmax.f32 %v788, %v790
        %853 = vmax.xlane.f32.xlu0 %v852
        %v854 = vpop.xlane.xlu0 %853
        %v855 = vmax.f32 %v794, %v796
        %856 = vmax.xlane.f32.xlu0 %v855
        %v857 = vpop.xlane.xlu0 %856
        %v858 = vmax.f32 %v800, %v802
        %859 = vmax.xlane.f32.xlu0 %v858
        %v860 = vpop.xlane.xlu0 %859
        %v861 = vmax.f32 %v806, %v808
        %862 = vmax.xlane.f32.xlu0 %v861
        %v863 = vpop.xlane.xlu0 %862
        %v864 = vmax.f32 %v812, %v814
        %865 = vmax.xlane.f32.xlu0 %v864
        %v866 = vpop.xlane.xlu0 %865
        %v867 = vmax.f32 %v818, %v820
        %868 = vmax.xlane.f32.xlu0 %v867
        %v869 = vpop.xlane.xlu0 %868
        %v870 = vsub.f32 %v728, %v824
        %v871 = vsub.f32 %v730, %v824
        %v872 = vsub.f32 %v734, %v827
        %v873 = vsub.f32 %v736, %v827
        %v874 = vsub.f32 %v740, %v830
        %v875 = vsub.f32 %v742, %v830
        %v876 = vsub.f32 %v746, %v833
        %v877 = vsub.f32 %v748, %v833
        %v878 = vsub.f32 %v752, %v836
        %v879 = vsub.f32 %v754, %v836
        %v880 = vsub.f32 %v758, %v839
        %v881 = vsub.f32 %v760, %v839
        %v882 = vsub.f32 %v764, %v842
        %v883 = vsub.f32 %v766, %v842
        %v884 = vsub.f32 %v770, %v845
        %v885 = vsub.f32 %v772, %v845
        %v886 = vsub.f32 %v776, %v848
        %v887 = vsub.f32 %v778, %v848
        %v888 = vsub.f32 %v782, %v851
        %v889 = vsub.f32 %v784, %v851
        %v890 = vsub.f32 %v788, %v854
        %v891 = vsub.f32 %v790, %v854
        %v892 = vsub.f32 %v794, %v857
        %v893 = vsub.f32 %v796, %v857
        %v894 = vsub.f32 %v800, %v860
        %v895 = vsub.f32 %v802, %v860
        %v896 = vsub.f32 %v806, %v863
        %v897 = vsub.f32 %v808, %v863
        %v898 = vsub.f32 %v812, %v866
        %v899 = vsub.f32 %v814, %v866
        %v900 = vsub.f32 %v818, %v869
        %v901 = vsub.f32 %v820, %v869
        %v902 = vmul.f32 %v870, 1.442695
        %v903 = vpow.pop %v902
        %v904 = vmul.f32 %v871, 1.442695
        %v905 = vpow.pop %v904
        %v906 = vmul.f32 %v872, 1.442695
        %v907 = vpow.pop %v906
        %v908 = vmul.f32 %v873, 1.442695
        %v909 = vpow.pop %v908
        %v910 = vmul.f32 %v874, 1.442695
        %v911 = vpow.pop %v910
        %v912 = vmul.f32 %v875, 1.442695
        %v913 = vpow.pop %v912
        %v914 = vmul.f32 %v876, 1.442695
        %v915 = vpow.pop %v914
        %v916 = vmul.f32 %v877, 1.442695
        %v917 = vpow.pop %v916
        %v918 = vmul.f32 %v878, 1.442695
        %v919 = vpow.pop %v918
        %v920 = vmul.f32 %v879, 1.442695
        %v921 = vpow.pop %v920
        %v922 = vmul.f32 %v880, 1.442695
        %v923 = vpow.pop %v922
        %v924 = vmul.f32 %v881, 1.442695
        %v925 = vpow.pop %v924
        %v926 = vmul.f32 %v882, 1.442695
        %v927 = vpow.pop %v926
        %v928 = vmul.f32 %v883, 1.442695
        %v929 = vpow.pop %v928
        %v930 = vmul.f32 %v884, 1.442695
        %v931 = vpow.pop %v930
        %v932 = vmul.f32 %v885, 1.442695
        %v933 = vpow.pop %v932
        %v934 = vmul.f32 %v886, 1.442695
        %v935 = vpow.pop %v934
        %v936 = vmul.f32 %v887, 1.442695
        %v937 = vpow.pop %v936
        %v938 = vmul.f32 %v888, 1.442695
        %v939 = vpow.pop %v938
        %v940 = vmul.f32 %v889, 1.442695
        %v941 = vpow.pop %v940
        %v942 = vmul.f32 %v890, 1.442695
        %v943 = vpow.pop %v942
        %v944 = vmul.f32 %v891, 1.442695
        %v945 = vpow.pop %v944
        %v946 = vmul.f32 %v892, 1.442695
        %v947 = vpow.pop %v946
        %v948 = vmul.f32 %v893, 1.442695
        %v949 = vpow.pop %v948
        %v950 = vmul.f32 %v894, 1.442695
        %v951 = vpow.pop %v950
        %v952 = vmul.f32 %v895, 1.442695
        %v953 = vpow.pop %v952
        %v954 = vmul.f32 %v896, 1.442695
        %v955 = vpow.pop %v954
        %v956 = vmul.f32 %v897, 1.442695
        %v957 = vpow.pop %v956
        %v958 = vmul.f32 %v898, 1.442695
        %v959 = vpow.pop %v958
        %v960 = vmul.f32 %v899, 1.442695
        %v961 = vpow.pop %v960
        %v962 = vmul.f32 %v900, 1.442695
        %v963 = vpow.pop %v962
        %v964 = vmul.f32 %v901, 1.442695
        %v965 = vpow.pop %v964
        %v966 = vadd.f32 %v903, %v905
        %967 = vadd.xlane.f32.xlu0 %v966
        %v968 = vpop.xlane.xlu0 %967
        %v969 = vadd.f32 %v907, %v909
        %970 = vadd.xlane.f32.xlu0 %v969
        %v971 = vpop.xlane.xlu0 %970
        %v972 = vadd.f32 %v911, %v913
        %973 = vadd.xlane.f32.xlu0 %v972
        %v974 = vpop.xlane.xlu0 %973
        %v975 = vadd.f32 %v915, %v917
        %976 = vadd.xlane.f32.xlu0 %v975
        %v977 = vpop.xlane.xlu0 %976
        %v978 = vadd.f32 %v919, %v921
        %979 = vadd.xlane.f32.xlu0 %v978
        %v980 = vpop.xlane.xlu0 %979
        %v981 = vadd.f32 %v923, %v925
        %982 = vadd.xlane.f32.xlu0 %v981
        %v983 = vpop.xlane.xlu0 %982
        %v984 = vadd.f32 %v927, %v929
        %985 = vadd.xlane.f32.xlu0 %v984
        %v986 = vpop.xlane.xlu0 %985
        %v987 = vadd.f32 %v931, %v933
        %988 = vadd.xlane.f32.xlu0 %v987
        %v989 = vpop.xlane.xlu0 %988
        %v990 = vadd.f32 %v935, %v937
        %991 = vadd.xlane.f32.xlu0 %v990
        %v992 = vpop.xlane.xlu0 %991
        %v993 = vadd.f32 %v939, %v941
        %994 = vadd.xlane.f32.xlu0 %v993
        %v995 = vpop.xlane.xlu0 %994
        %v996 = vadd.f32 %v943, %v945
        %997 = vadd.xlane.f32.xlu0 %v996
        %v998 = vpop.xlane.xlu0 %997
        %v999 = vadd.f32 %v947, %v949
        %1000 = vadd.xlane.f32.xlu0 %v999
        %v1001 = vpop.xlane.xlu0 %1000
        %v1002 = vadd.f32 %v951, %v953
        %1003 = vadd.xlane.f32.xlu0 %v1002
        %v1004 = vpop.xlane.xlu0 %1003
        %v1005 = vadd.f32 %v955, %v957
        %1006 = vadd.xlane.f32.xlu0 %v1005
        %v1007 = vpop.xlane.xlu0 %1006
        %v1008 = vadd.f32 %v959, %v961
        %1009 = vadd.xlane.f32.xlu0 %v1008
        %v1010 = vpop.xlane.xlu0 %1009
        %v1011 = vadd.f32 %v963, %v965
        %1012 = vadd.xlane.f32.xlu0 %v1011
        %v1013 = vpop.xlane.xlu0 %1012
        %v1014 = vrcp.pop %v968
        %v1015 = vrcp.pop %v971
        %v1016 = vrcp.pop %v974
        %v1017 = vrcp.pop %v977
        %v1018 = vrcp.pop %v980
        %v1019 = vrcp.pop %v983
        %v1020 = vrcp.pop %v986
        %v1021 = vrcp.pop %v989
        %v1022 = vrcp.pop %v992
        %v1023 = vrcp.pop %v995
        %v1024 = vrcp.pop %v998
        %v1025 = vrcp.pop %v1001
        %v1026 = vrcp.pop %v1004
        %v1027 = vrcp.pop %v1007
        %v1028 = vrcp.pop %v1010
        %v1029 = vrcp.pop %v1013
        %v1030 = vmul.f32 %v903, %v1014
        %v1031 = vmul.f32 %v905, %v1014
        %v1032 = vmul.f32 %v907, %v1015
        %v1033 = vmul.f32 %v909, %v1015
        %v1034 = vmul.f32 %v911, %v1016
        %v1035 = vmul.f32 %v913, %v1016
        %v1036 = vmul.f32 %v915, %v1017
        %v1037 = vmul.f32 %v917, %v1017
        %v1038 = vmul.f32 %v919, %v1018
        %v1039 = vmul.f32 %v921, %v1018
        %v1040 = vmul.f32 %v923, %v1019
        %v1041 = vmul.f32 %v925, %v1019
        %v1042 = vmul.f32 %v927, %v1020
        %v1043 = vmul.f32 %v929, %v1020
        %v1044 = vmul.f32 %v931, %v1021
        %v1045 = vmul.f32 %v933, %v1021
        %v1046 = vmul.f32 %v935, %v1022
        %v1047 = vmul.f32 %v937, %v1022
        %v1048 = vmul.f32 %v939, %v1023
        %v1049 = vmul.f32 %v941, %v1023
        %v1050 = vmul.f32 %v943, %v1024
        %v1051 = vmul.f32 %v945, %v1024
        %v1052 = vmul.f32 %v947, %v1025
        %v1053 = vmul.f32 %v949, %v1025
        %v1054 = vmul.f32 %v951, %v1026
        %v1055 = vmul.f32 %v953, %v1026
        %v1056 = vmul.f32 %v955, %v1027
        %v1057 = vmul.f32 %v957, %v1027
        %v1058 = vmul.f32 %v959, %v1028
        %v1059 = vmul.f32 %v961, %v1028
        %v1060 = vmul.f32 %v963, %v1029
        %v1061 = vmul.f32 %v965, %v1029
        %1062 = vmatprep.subr.mxu0 %v1031
        %1063 = vmatpush1.xpose.msra.mxu0 %v1030
        %1064 = vmatprep.subr.mxu0 %v1033
        %1065 = vmatpush1.xpose.msra.mxu0 %v1032
        %1066 = vmatprep.subr.mxu0 %v1035
        %1067 = vmatpush1.xpose.msra.mxu0 %v1034
        %1068 = vmatprep.subr.mxu0 %v1037
        %1069 = vmatpush1.xpose.msra.mxu0 %v1036
        %1070 = vmatprep.subr.mxu0 %v1039
        %1071 = vmatpush1.xpose.msra.mxu0 %v1038
        %1072 = vmatprep.subr.mxu0 %v1041
        %1073 = vmatpush1.xpose.msra.mxu0 %v1040
        %1074 = vmatprep.subr.mxu0 %v1043
        %1075 = vmatpush1.xpose.msra.mxu0 %v1042
        %1076 = vmatprep.subr.mxu0 %v1045
        %1077 = vmatpush1.xpose.msra.mxu0 %v1044
        %1078 = vmatprep.subr.mxu0 %v1047
        %1079 = vmatpush1.xpose.msra.mxu0 %v1046
        %1080 = vmatprep.subr.mxu0 %v1049
        %1081 = vmatpush1.xpose.msra.mxu0 %v1048
        %1082 = vmatprep.subr.mxu0 %v1051
        %1083 = vmatpush1.xpose.msra.mxu0 %v1050
        %1084 = vmatprep.subr.mxu0 %v1053
        %1085 = vmatpush1.xpose.msra.mxu0 %v1052
        %1086 = vmatprep.subr.mxu0 %v1055
        %1087 = vmatpush1.xpose.msra.mxu0 %v1054
        %1088 = vmatprep.subr.mxu0 %v1057
        %1089 = vmatpush1.xpose.msra.mxu0 %v1056
        %1090 = vmatprep.subr.mxu0 %v1059
        %1091 = vmatpush1.xpose.msra.mxu0 %v1058
        %1092 = vmatprep.subr.mxu0 %v1061
        %1093 = vmatpush1.xpose.msra.mxu0 %v1060
        %1094 = vmatprep.subr.mxu0 0.0
        %1095 = vmatpush1.xpose.msra.mxu0 0.0
        %1096 = vmatprep.subr.mxu0 0.0
        %1097 = vmatpush1.xpose.msra.mxu0 0.0
        %1098 = vmatprep.subr.mxu0 0.0
        %1099 = vmatpush1.xpose.msra.mxu0 0.0
        %1100 = vmatprep.subr.mxu0 0.0
        %1101 = vmatpush1.xpose.msra.mxu0 0.0
        %1102 = vmatprep.subr.mxu0 0.0
        %1103 = vmatpush1.xpose.msra.mxu0 0.0
        %1104 = vmatprep.subr.mxu0 0.0
        %1105 = vmatpush1.xpose.msra.mxu0 0.0
        %1106 = vmatprep.subr.mxu0 0.0
        %1107 = vmatpush1.xpose.msra.mxu0 0.0
        %1108 = vmatprep.subr.mxu0 0.0
        %1109 = vmatpush1.xpose.msra.mxu0 0.0
        %1110 = vmatprep.subr.mxu0 0.0
        %1111 = vmatpush1.xpose.msra.mxu0 0.0
        %1112 = vmatprep.subr.mxu0 0.0
        %1113 = vmatpush1.xpose.msra.mxu0 0.0
        %1114 = vmatprep.subr.mxu0 0.0
        %1115 = vmatpush1.xpose.msra.mxu0 0.0
        %1116 = vmatprep.subr.mxu0 0.0
        %1117 = vmatpush1.xpose.msra.mxu0 0.0
        %1118 = vmatprep.subr.mxu0 0.0
        %1119 = vmatpush1.xpose.msra.mxu0 0.0
        %1120 = vmatprep.subr.mxu0 0.0
        %1121 = vmatpush1.xpose.msra.mxu0 0.0
        %1122 = vmatprep.subr.mxu0 0.0
        %1123 = vmatpush1.xpose.msra.mxu0 0.0
        %1124 = vmatprep.subr.mxu0 0.0
        %1125 = vmatpush1.xpose.msra.mxu0 0.0
        %1126 = vmatprep.mubr.f32.mxu0 %v456
        %1127 = vmatmul.mubr.f32.gmra.mrb[0].mxu0 %v454
        %v1128 = vpop.f32.mrb[0].mxu0
        %v1129 = vadd.f32 0.0, %v1128
        %v1130 = vpop.f32.mrb[0].mxu0
        %1131 = vmatprep.mubr.f32.mxu0 %v462
        %1132 = vmatmul.mubr.f32.gmra.mrb[0].mxu0 %v460
        %v1133 = vpop.f32.mrb[0].mxu0
        %v1134 = vadd.f32 0.0, %v1133
        %v1135 = vpop.f32.mrb[0].mxu0
        %1136 = vmatprep.mubr.f32.mxu0 %v468
        %1137 = vmatmul.mubr.f32.gmra.mrb[0].mxu0 %v466
        %v1138 = vpop.f32.mrb[0].mxu0
        %v1139 = vadd.f32 0.0, %v1138
        %v1140 = vpop.f32.mrb[0].mxu0
        %1141 = vmatprep.mubr.f32.mxu0 %v474
        %1142 = vmatmul.mubr.f32.gmra.mrb[0].mxu0 %v472
        %v1143 = vpop.f32.mrb[0].mxu0
        %v1144 = vadd.f32 0.0, %v1143
        %v1145 = vpop.f32.mrb[0].mxu0
        %1146 = vmatprep.mubr.f32.mxu0 %v480
        %1147 = vmatmul.mubr.f32.gmra.mrb[0].mxu0 %v478
        %v1148 = vpop.f32.mrb[0].mxu0
        %v1149 = vadd.f32 0.0, %v1148
        %v1150 = vpop.f32.mrb[0].mxu0
        %1151 = vmatprep.mubr.f32.mxu0 %v486
        %1152 = vmatmul.mubr.f32.gmra.mrb[0].mxu0 %v484
        %v1153 = vpop.f32.mrb[0].mxu0
        %v1154 = vadd.f32 0.0, %v1153
        %v1155 = vpop.f32.mrb[0].mxu0
        %1156 = vmatprep.mubr.f32.mxu0 %v492
        %1157 = vmatmul.mubr.f32.gmra.mrb[0].mxu0 %v490
        %v1158 = vpop.f32.mrb[0].mxu0
        %v1159 = vadd.f32 0.0, %v1158
        %v1160 = vpop.f32.mrb[0].mxu0
        %1161 = vmatprep.mubr.f32.mxu0 %v498
        %1162 = vmatmul.mubr.f32.gmra.mrb[0].mxu0 %v496
        %v1163 = vpop.f32.mrb[0].mxu0
        %v1164 = vadd.f32 0.0, %v1163
        %v1165 = vpop.f32.mrb[0].mxu0
        %1166 = vdwg.mxu0
        %s1167 = sld [smem:[#allocation2]]
        %v1168 = vstv %s1167
        %v1169 = vmul.f32 %v1168, %v1129
        %v1170 = vmul.f32 %v1168, %v1134
        %v1171 = vmul.f32 %v1168, %v1139
        %v1172 = vmul.f32 %v1168, %v1144
        %v1173 = vmul.f32 %v1168, %v1149
        %v1174 = vmul.f32 %v1168, %v1154
        %v1175 = vmul.f32 %v1168, %v1159
        %v1176 = vmul.f32 %v1168, %v1164
        %v1177 = vadd.f32 %v1169, %v282
        %v1178 = vadd.f32 %v1170, %v283
        %v1179 = vadd.f32 %v1171, %v284
        %v1180 = vadd.f32 %v1172, %v285
        %v1181 = vadd.f32 %v1173, %v286
        %v1182 = vadd.f32 %v1174, %v287
        %v1183 = vadd.f32 %v1175, %v288
        %v1184 = vadd.f32 %v1176, %v289
        %1185 = vst [vmem:[%s255] sm:$0xff] %v1177
        %1186 = vst [vmem:[%s255 + $0x8] sm:$0xff] %v1178
        %1187 = vst [vmem:[%s255 + $0x10] sm:$0xff] %v1179
        %1188 = vst [vmem:[%s255 + $0x18] sm:$0xff] %v1180
        %1189 = vst [vmem:[%s255 + $0x20] sm:$0xff] %v1181
        %1190 = vst [vmem:[%s255 + $0x28] sm:$0xff] %v1182
        %1191 = vst [vmem:[%s255 + $0x30] sm:$0xff] %v1183
        %1192 = vst [vmem:[%s255 + $0x38] sm:$0xff] %v1184
        %s1193 = sand.u32 %s171, 1
        %s1194 = sand.u32 %s171, 1
        %s1195 = smul.addr %s1194, 64
        %s1196 = scalar_lea.vmem [#allocation3], %s1195
        // Predicated region
        $region45: #{self_attention_pallas.1} parent=43 // pred_check
          %p1197 = pneg %p181
        $region46: #{self_attention_pallas.1} parent=43 // pred_check_branch
          %1199 = sbr.rel (%p1197) target = $region48
        $region47: #{self_attention_pallas.1} parent=43 // pred_region
          %s1200 = smul.addr %s22, 16
          %s1201 = sadd.s32 %s23, %s1200
          %s1202 = smul.addr %s1201, 8
          %s1203 = scalar_lea.vmem %s6, %s1202
          // Predicated region
          $region49: #{self_attention_pallas.1} parent=47 // pred_check
            _
          $region50: #{self_attention_pallas.1} parent=47 // pred_check_branch
            %1205 = sbr.rel (0) target = $region52
          $region51: #{self_attention_pallas.1} parent=47 // pred_region
            // Predicated region
            $region53: #{self_attention_pallas.1} parent=51 // pred_check
              _
            $region54: #{self_attention_pallas.1} parent=51 // pred_check_branch
              %1207 = sbr.rel (0) target = $region56
            $region55: #{self_attention_pallas.1} parent=51 // pred_region
              // Predicated region
              $region68: #{self_attention_pallas.1} parent=55 // pred_check
                _
              $region69: #{self_attention_pallas.1} parent=55 // pred_check_branch
                %1236 = sbr.rel (0) target = $region71
              $region70: #{self_attention_pallas.1} parent=55 // pred_region
                loop: start=0, step=1, limit=1
                $region72: #{self_attention_pallas.1} parent=70 // loop_pre_header
                  _
                $region73: #{self_attention_pallas.1} parent=70 // loop_header
                  %s1238 = sphi 0, %s1242
                  %p1239 = scmp.ge.s32.totalorder %s1238, 1
                  %s1243 = sphi %s1196, %s1196
                  %s1244 = sphi %s1203, %s1203
                $region74: #{self_attention_pallas.1} parent=70 // loop_header_branch
                  %1241 = sbr.rel (%p1239) target = $region78
                $region75: #{self_attention_pallas.1} parent=70 // loop_body
                  %v1245 = vld [vmem:[%s1243] sm:$0xff]
                  %1246 = vst [vmem:[%s1244] sm:$0xff] %v1245
                  %v1247 = vld [vmem:[%s1243 + $0x8] sm:$0xff]
                  %1248 = vst [vmem:[%s1244 + $0x10] sm:$0xff] %v1247
                  %v1249 = vld [vmem:[%s1243 + $0x10] sm:$0xff]
                  %1250 = vst [vmem:[%s1244 + $0x20] sm:$0xff] %v1249
                  %v1251 = vld [vmem:[%s1243 + $0x18] sm:$0xff]
                  %1252 = vst [vmem:[%s1244 + $0x30] sm:$0xff] %v1251
                  %v1253 = vld [vmem:[%s1243 + $0x20] sm:$0xff]
                  %1254 = vst [vmem:[%s1244 + $0x40] sm:$0xff] %v1253
                  %v1255 = vld [vmem:[%s1243 + $0x28] sm:$0xff]
                  %1256 = vst [vmem:[%s1244 + $0x50] sm:$0xff] %v1255
                  %v1257 = vld [vmem:[%s1243 + $0x30] sm:$0xff]
                  %1258 = vst [vmem:[%s1244 + $0x60] sm:$0xff] %v1257
                  %v1259 = vld [vmem:[%s1243 + $0x38] sm:$0xff]
                  %1260 = vst [vmem:[%s1244 + $0x70] sm:$0xff] %v1259
                $region76: #{self_attention_pallas.1} parent=70 // loop_footer
                  %s1242 = sadd.s32 1, %s1238
                $region77: #{self_attention_pallas.1} parent=70 // loop_footer_branch
                  %1237 = sbr.rel target = $region73
                $region78: #{self_attention_pallas.1} parent=70 // loop_exit
                  _
              $region71: #{self_attention_pallas.1} parent=55 // pred_fallthru
                _
              // Predicated region
              $region79: #{self_attention_pallas.1} parent=55 // pred_check
                _
              $region80: #{self_attention_pallas.1} parent=55 // pred_check_branch
                %1262 = sbr.rel target = $region82
              $region81: #{self_attention_pallas.1} parent=55 // pred_region
                _
              $region82: #{self_attention_pallas.1} parent=55 // pred_fallthru
                _
            $region56: #{self_attention_pallas.1} parent=51 // pred_fallthru
              _
            // Predicated region
            $region57: #{self_attention_pallas.1} parent=51 // pred_check
              _
            $region58: #{self_attention_pallas.1} parent=51 // pred_check_branch
              %1209 = sbr.rel target = $region60
            $region59: #{self_attention_pallas.1} parent=51 // pred_region
              loop: start=0, step=1, limit=1
              $region61: #{self_attention_pallas.1} parent=59 // loop_pre_header
                _
              $region62: #{self_attention_pallas.1} parent=59 // loop_header
                %s1212 = sphi 0, %s1216
                %p1213 = scmp.ge.s32.totalorder %s1212, 1
                %s1217 = sphi %s1196, %s1196
                %s1218 = sphi %s1203, %s1203
              $region63: #{self_attention_pallas.1} parent=59 // loop_header_branch
                %1215 = sbr.rel (%p1213) target = $region67
              $region64: #{self_attention_pallas.1} parent=59 // loop_body
                %v1219 = vld [vmem:[%s1217] sm:$0xff]
                %1220 = vst [vmem:[%s1218] sm:$0xff] %v1219
                %v1221 = vld [vmem:[%s1217 + $0x8] sm:$0xff]
                %1222 = vst [vmem:[%s1218 + $0x10] sm:$0xff] %v1221
                %v1223 = vld [vmem:[%s1217 + $0x10] sm:$0xff]
                %1224 = vst [vmem:[%s1218 + $0x20] sm:$0xff] %v1223
                %v1225 = vld [vmem:[%s1217 + $0x18] sm:$0xff]
                %1226 = vst [vmem:[%s1218 + $0x30] sm:$0xff] %v1225
                %v1227 = vld [vmem:[%s1217 + $0x20] sm:$0xff]
                %1228 = vst [vmem:[%s1218 + $0x40] sm:$0xff] %v1227
                %v1229 = vld [vmem:[%s1217 + $0x28] sm:$0xff]
                %1230 = vst [vmem:[%s1218 + $0x50] sm:$0xff] %v1229
                %v1231 = vld [vmem:[%s1217 + $0x30] sm:$0xff]
                %1232 = vst [vmem:[%s1218 + $0x60] sm:$0xff] %v1231
                %v1233 = vld [vmem:[%s1217 + $0x38] sm:$0xff]
                %1234 = vst [vmem:[%s1218 + $0x70] sm:$0xff] %v1233
              $region65: #{self_attention_pallas.1} parent=59 // loop_footer
                %s1216 = sadd.s32 1, %s1212
              $region66: #{self_attention_pallas.1} parent=59 // loop_footer_branch
                %1211 = sbr.rel target = $region62
              $region67: #{self_attention_pallas.1} parent=59 // loop_exit
                _
            $region60: #{self_attention_pallas.1} parent=51 // pred_fallthru
              _
          $region52: #{self_attention_pallas.1} parent=47 // pred_fallthru
            _
          %1263 = vnop
        $region48: #{self_attention_pallas.1} parent=43 // pred_fallthru
          _
      $region44: #{self_attention_pallas.1} parent=5 // pred_fallthru
        _
      %p1264 = scmp.le.s32.totalorder 2, %s13
      // Predicated region
      $region83: #{self_attention_pallas.1} parent=5 // pred_check
        %p1265 = pneg %p1264
      $region84: #{self_attention_pallas.1} parent=5 // pred_check_branch
        %1267 = sbr.rel (%p1265) target = $region86
      $region85: #{self_attention_pallas.1} parent=5 // pred_region
        %s1268 = ssub.s32 %s13, 2
        // Predicated region
        $region87: #{self_attention_pallas.1} parent=85 // pred_check
          %p1269 = pneg %p187
        $region88: #{self_attention_pallas.1} parent=85 // pred_check_branch
          %1271 = sbr.rel (%p1269) target = $region90
        $region89: #{self_attention_pallas.1} parent=85 // pred_region
          %s1272 = sand.u32 %s172, 1
          %s1273 = sand.u32 %s172, 1
          %s1274 = smul.addr %s1273, 64
          %s1275 = scalar_lea.vmem [#allocation3], %s1274
        $region90: #{self_attention_pallas.1} parent=85 // pred_fallthru
          _
      $region86: #{self_attention_pallas.1} parent=5 // pred_fallthru
        _
    $region6: #{self_attention_pallas.1} parent=1 // loop_footer
      %s17 = sadd.s32 1, %s13
    $region7: #{self_attention_pallas.1} parent=1 // loop_footer_branch
      %12 = sbr.rel target = $region3
    $region8: #{self_attention_pallas.1} parent=1 // loop_exit
      _

</llo_original>
